<compile_context>
chip_gen: v7x
topology: tpu7x:2x2x1
jax: 0.10.0
libtpu: 0.0.40
codegen_flags: <defaults>
</compile_context>

<pallas_src>
import functools

import jax
import jax.numpy as jnp
from jax import lax
from jax.experimental import pallas as pl
from jax.experimental.pallas import tpu as pltpu


def _round_up(x: int, m: int) -> int:
    return ((x + m - 1) // m) * m


def critic_kernel(x_ref, w1_ref, aux1_ref, w2_ref, aux2_ref, w3_ref, b3_ref,
                  o_ref, *, eps):
    x = x_ref[...].astype(jnp.float32)                        # (TB, n_traits)

    def block(h, w_ref, aux_ref):
        w = w_ref[...]
        # MXU matmul. bf16 operands on the big (H x H) layer, f32 accumulation.
        if w.dtype == jnp.bfloat16:
            h = h.astype(jnp.bfloat16)
        h = jnp.dot(h, w, preferred_element_type=jnp.float32)  # (TB, H) f32
        h = h + aux_ref[0:1, :]                                 # + bias

        # One-pass LayerNorm statistics: the two lane reductions (XLU) are
        # independent and can issue concurrently.
        hdim = h.shape[-1]
        s1 = jnp.sum(h, axis=-1, keepdims=True)                 # (TB, 1)
        s2 = jnp.sum(h * h, axis=-1, keepdims=True)             # (TB, 1)
        mean = s1 * (1.0 / hdim)
        var = jnp.maximum(s2 * (1.0 / hdim) - mean * mean, 0.0)
        inv = lax.rsqrt(var + eps)                               # EUP rsqrt

        # Folded affine: h_out = h*scale + shift, then ReLU.
        scale = aux_ref[1:2, :] * inv                            # gamma * inv
        shift = aux_ref[2:3, :] - mean * scale                   # beta - mean*scale
        return jnp.maximum(h * scale + shift, 0.0)

    h = block(x, w1_ref, aux1_ref)                               # (TB, H)
    h = block(h, w2_ref, aux2_ref)                               # (TB, H)

    # Final Linear(H -> 1): VPU multiply + XLU lane reduction; b3 from SMEM.
    out = jnp.sum(h * w3_ref[...], axis=-1, keepdims=True) + b3_ref[0, 0]
    o_ref[...] = out.astype(o_ref.dtype)
    # TODO(synk): for very large B on v5e, a lane-dense (1, TB) output layout
    # would avoid masked 1-lane stores; skipped here since the write volume is
    # negligible next to the matmuls and it keeps the (B, 1) contract clean.


def critic_forward(state, params, *, eps=1e-5, block_b=512):
    """state: (B, n_traits) -> (B, 1). Matches Critic.forward semantics.

    Weights use the (D_in, D_out) convention, i.e. y = x @ W + b
    (transpose of PyTorch nn.Linear's stored weight)."""
    w1, b1, g1, beta1, w2, b2, g2, beta2, w3, b3 = params
    B, n_traits = state.shape
    H = w1.shape[1]

    # Operand packing: per-layer (bias, gamma, beta) stacked into one (3, H)
    # VMEM-resident tile; big matmul weight in bf16 (f32 accumulation in-kernel).
    w1_f = w1.astype(jnp.float32)                   # tiny K=8 layer stays f32
    w2_bf = w2.astype(jnp.bfloat16)                 # dominant matmul in bf16
    aux1 = jnp.stack([b1, g1, beta1], axis=0).astype(jnp.float32)   # (3, H)
    aux2 = jnp.stack([b2, g2, beta2], axis=0).astype(jnp.float32)   # (3, H)
    w3_row = w3.reshape(1, H).astype(jnp.float32)                   # (1, H)
    b3_s = b3.reshape(1, 1).astype(jnp.float32)                     # SMEM scalar

    # Batch tile: multiple of 8 sublanes, big enough to fill the MXU at large
    # B, without over-padding tiny batches. Per-step VMEM footprint stays small
    # on purpose (portable across v5e/v6e and v7x's halved 64 MiB VMEM).
    tb = min(block_b, max(8, _round_up(B, 8)))
    tb = _round_up(tb, 8)
    b_pad = _round_up(B, tb)
    if b_pad != B:
        state = jnp.pad(state, ((0, b_pad - B), (0, 0)))
    grid = (b_pad // tb,)

    vmem = pltpu.MemorySpace.VMEM
    kernel = functools.partial(critic_kernel, eps=eps)

    out = pl.pallas_call(
        kernel,
        grid=grid,
        in_specs=[
            # x: pipelined per batch tile.
            pl.BlockSpec((tb, n_traits), lambda i: (i, 0), memory_space=vmem),
            # Weights / aux: constant index_map -> DMA'd once, VMEM-resident.
            pl.BlockSpec((n_traits, H), lambda i: (0, 0), memory_space=vmem),
            pl.BlockSpec((3, H), lambda i: (0, 0), memory_space=vmem),
            pl.BlockSpec((H, H), lambda i: (0, 0), memory_space=vmem),
            pl.BlockSpec((3, H), lambda i: (0, 0), memory_space=vmem),
            pl.BlockSpec((1, H), lambda i: (0, 0), memory_space=vmem),
            # b3: scalar in SMEM (whole array, no tiling).
            pl.BlockSpec(memory_space=pltpu.MemorySpace.SMEM),
        ],
        out_specs=pl.BlockSpec((tb, 1), lambda i: (i, 0), memory_space=vmem),
        out_shape=jax.ShapeDtypeStruct((b_pad, 1), state.dtype),
        compiler_params=pltpu.CompilerParams(
            dimension_semantics=("parallel",)),
    )(state, w1_f, aux1, w2_bf, aux2, w3_row, b3_s)

    return out[:B]


def jax_reference(state, params, *, eps=1e-5):
    w1, b1, g1, beta1, w2, b2, g2, beta2, w3, b3 = params

    def block(h, w, b, g, beta):
        h = h @ w + b
        mean = h.mean(axis=-1, keepdims=True)
        var = ((h - mean) ** 2).mean(axis=-1, keepdims=True)
        h = (h - mean) / jnp.sqrt(var + eps)
        h = h * g + beta
        return jnp.maximum(h, 0.0)

    h = block(state, w1, b1, g1, beta1)
    h = block(h, w2, b2, g2, beta2)
    return h @ w3.reshape(-1, 1) + b3.reshape(1, 1)


if __name__ == "__main__":
    n_traits = 8
    hidden_dim = 256   # module default
    B = 4

    key0 = jax.random.PRNGKey(0)
    ks = jax.random.split(key0, 12)

    def u(k, shape, scale):
        return jax.random.uniform(k, shape, jnp.float32, -scale, scale)

    # Deterministic, non-trivial parameters (the PyTorch orthogonal / zero
    # init only changes the values, not the forward graph).
    params = (
        u(ks[0], (n_traits, hidden_dim), 0.1),     # w1
        u(ks[1], (hidden_dim,), 0.1),              # b1
        1.0 + u(ks[2], (hidden_dim,), 0.1),        # gamma1
        u(ks[3], (hidden_dim,), 0.1),              # beta1
        u(ks[4], (hidden_dim, hidden_dim), 0.1),   # w2
        u(ks[5], (hidden_dim,), 0.1),              # b2
        1.0 + u(ks[6], (hidden_dim,), 0.1),        # gamma2
        u(ks[7], (hidden_dim,), 0.1),              # beta2
        u(ks[8], (hidden_dim, 1), 0.1),            # w3
        u(ks[9], (1,), 0.1),                       # b3
    )

    # Main check: tiny batch (B=4, single grid step).
    state = jax.random.normal(ks[10], (B, n_traits), jnp.float32)
    out = jax.block_until_ready(critic_forward(state, params))
    ref = jax_reference(state, params)
    assert out.shape == (B, 1)
    err = jnp.max(jnp.abs(out - ref))
    # Tolerance loosened vs the all-f32 version: the layer-2 matmul runs with
    # bf16 operands (f32 accumulation).
    assert jnp.allclose(out, ref, atol=2e-2, rtol=2e-2), (
        f"mismatch vs JAX reference (B={B}): max abs err {err:.3e}")

    # Exercise the multi-step grid + padded tail path (B not a multiple of TB).
    B2 = 37
    state2 = jax.random.normal(ks[11], (B2, n_traits), jnp.float32)
    out2 = jax.block_until_ready(critic_forward(state2, params, block_b=16))
    ref2 = jax_reference(state2, params)
    assert out2.shape == (B2, 1)
    err2 = jnp.max(jnp.abs(out2 - ref2))
    assert jnp.allclose(out2, ref2, atol=2e-2, rtol=2e-2), (
        f"mismatch vs JAX reference (B={B2}): max abs err {err2:.3e}")

    print("KERNEL_OK")
</pallas_src>

<mosaic_0001>
module attributes {stable_mosaic.version = 11 : i64} {
  func.func @critic_kernel(%arg0: i32, %arg1: memref<8x8xf32, #tpu.memory_space<vmem>>, %arg2: memref<8x256xf32, #tpu.memory_space<vmem>>, %arg3: memref<3x256xf32, #tpu.memory_space<vmem>>, %arg4: memref<256x256xbf16, #tpu.memory_space<vmem>>, %arg5: memref<3x256xf32, #tpu.memory_space<vmem>>, %arg6: memref<1x256xf32, #tpu.memory_space<vmem>>, %arg7: memref<1x1xf32, #tpu.memory_space<smem>>, %arg8: memref<8x1xf32, #tpu.memory_space<vmem>>) attributes {dimension_semantics = [#tpu.dimension_semantics<parallel>], iteration_bounds = array<i64: 1>, scalar_prefetch = 0 : i64, scratch_operands = 0 : i64, tpu.core_type = #tpu.core_type<tc>, window_params = [{transform_indices = @transform_0, window_bounds = array<i64: 8, 8>}, {pipeline_mode = #tpu.pipeline_mode<synchronous>, transform_indices = @transform_1, window_bounds = array<i64: 8, 256>}, {pipeline_mode = #tpu.pipeline_mode<synchronous>, transform_indices = @transform_2, window_bounds = array<i64: 3, 256>}, {pipeline_mode = #tpu.pipeline_mode<synchronous>, transform_indices = @transform_3, window_bounds = array<i64: 256, 256>}, {pipeline_mode = #tpu.pipeline_mode<synchronous>, transform_indices = @transform_4, window_bounds = array<i64: 3, 256>}, {pipeline_mode = #tpu.pipeline_mode<synchronous>, transform_indices = @transform_5, window_bounds = array<i64: 1, 256>}, {transform_indices = @transform_6, window_bounds = array<i64: 1, 1>}, {transform_indices = @transform_7, window_bounds = array<i64: 8, 1>}]} {
    %c0 = arith.constant 0 : index
    %c0_0 = arith.constant 0 : index
    %0 = vector.load %arg1[%c0, %c0_0] : memref<8x8xf32, #tpu.memory_space<vmem>>, vector<8x8xf32>
    %c0_1 = arith.constant 0 : index
    %c0_2 = arith.constant 0 : index
    %1 = vector.load %arg2[%c0_1, %c0_2] : memref<8x256xf32, #tpu.memory_space<vmem>>, vector<8x256xf32>
    %cst = arith.constant dense<0.000000e+00> : vector<8x256xf32>
    %2 = tpu.matmul %0, %1, %cst {dimension_numbers = #tpu.dot_dimension_numbers<[1], [0], [0], [1], [0, 0, 1, 1], [], []>} : vector<8x8xf32>, vector<8x256xf32>, vector<8x256xf32> -> vector<8x256xf32>
    %c0_3 = arith.constant 0 : index
    %c0_4 = arith.constant 0 : index
    %3 = vector.load %arg3[%c0_3, %c0_4] : memref<3x256xf32, #tpu.memory_space<vmem>>, vector<1x256xf32>
    %4 = vector.broadcast %3 : vector<1x256xf32> to vector<8x256xf32>
    %5 = arith.addf %2, %4 : vector<8x256xf32>
    %cst_5 = arith.constant dense<0.000000e+00> : vector<8xf32>
    %6 = vector.multi_reduction <add>, %5, %cst_5 [1] : vector<8x256xf32> to vector<8xf32>
    %7 = vector.shape_cast %6 : vector<8xf32> to vector<8x1xf32>
    %8 = arith.mulf %5, %5 : vector<8x256xf32>
    %cst_6 = arith.constant dense<0.000000e+00> : vector<8xf32>
    %9 = vector.multi_reduction <add>, %8, %cst_6 [1] : vector<8x256xf32> to vector<8xf32>
    %10 = vector.shape_cast %9 : vector<8xf32> to vector<8x1xf32>
    %cst_7 = arith.constant 3.906250e-03 : f32
    %11 = vector.broadcast %cst_7 : f32 to vector<8x1xf32>
    %12 = arith.mulf %7, %11 : vector<8x1xf32>
    %cst_8 = arith.constant 3.906250e-03 : f32
    %13 = vector.broadcast %cst_8 : f32 to vector<8x1xf32>
    %14 = arith.mulf %10, %13 : vector<8x1xf32>
    %15 = arith.mulf %12, %12 : vector<8x1xf32>
    %16 = arith.subf %14, %15 : vector<8x1xf32>
    %cst_9 = arith.constant 0.000000e+00 : f32
    %17 = vector.broadcast %cst_9 : f32 to vector<8x1xf32>
    %18 = arith.maximumf %16, %17 : vector<8x1xf32>
    %cst_10 = arith.constant 9.99999974E-6 : f32
    %19 = vector.broadcast %cst_10 : f32 to vector<8x1xf32>
    %20 = arith.addf %18, %19 : vector<8x1xf32>
    %21 = math.rsqrt %20 : vector<8x1xf32>
    %c1 = arith.constant 1 : index
    %c0_11 = arith.constant 0 : index
    %22 = vector.load %arg3[%c1, %c0_11] : memref<3x256xf32, #tpu.memory_space<vmem>>, vector<1x256xf32>
    %23 = vector.broadcast %22 : vector<1x256xf32> to vector<8x256xf32>
    %24 = vector.broadcast %21 : vector<8x1xf32> to vector<8x256xf32>
    %25 = arith.mulf %23, %24 : vector<8x256xf32>
    %c2 = arith.constant 2 : index
    %c0_12 = arith.constant 0 : index
    %26 = vector.load %arg3[%c2, %c0_12] : memref<3x256xf32, #tpu.memory_space<vmem>>, vector<1x256xf32>
    %27 = vector.broadcast %12 : vector<8x1xf32> to vector<8x256xf32>
    %28 = arith.mulf %27, %25 : vector<8x256xf32>
    %29 = vector.broadcast %26 : vector<1x256xf32> to vector<8x256xf32>
    %30 = arith.subf %29, %28 : vector<8x256xf32>
    %31 = arith.mulf %5, %25 : vector<8x256xf32>
    %32 = arith.addf %31, %30 : vector<8x256xf32>
    %cst_13 = arith.constant 0.000000e+00 : f32
    %33 = vector.broadcast %cst_13 : f32 to vector<8x256xf32>
    %34 = arith.maximumf %32, %33 : vector<8x256xf32>
    %c0_14 = arith.constant 0 : index
    %c0_15 = arith.constant 0 : index
    %35 = vector.load %arg4[%c0_14, %c0_15] : memref<256x256xbf16, #tpu.memory_space<vmem>>, vector<256x256xbf16>
    %36 = arith.truncf %34 : vector<8x256xf32> to vector<8x256xbf16>
    %cst_16 = arith.constant dense<0.000000e+00> : vector<8x256xf32>
    %37 = tpu.matmul %36, %35, %cst_16 {dimension_numbers = #tpu.dot_dimension_numbers<[1], [0], [0], [1], [0, 0, 1, 1], [], []>} : vector<8x256xbf16>, vector<256x256xbf16>, vector<8x256xf32> -> vector<8x256xf32>
    %c0_17 = arith.constant 0 : index
    %c0_18 = arith.constant 0 : index
    %38 = vector.load %arg5[%c0_17, %c0_18] : memref<3x256xf32, #tpu.memory_space<vmem>>, vector<1x256xf32>
    %39 = vector.broadcast %38 : vector<1x256xf32> to vector<8x256xf32>
    %40 = arith.addf %37, %39 : vector<8x256xf32>
    %cst_19 = arith.constant dense<0.000000e+00> : vector<8xf32>
    %41 = vector.multi_reduction <add>, %40, %cst_19 [1] : vector<8x256xf32> to vector<8xf32>
    %42 = vector.shape_cast %41 : vector<8xf32> to vector<8x1xf32>
    %43 = arith.mulf %40, %40 : vector<8x256xf32>
    %cst_20 = arith.constant dense<0.000000e+00> : vector<8xf32>
    %44 = vector.multi_reduction <add>, %43, %cst_20 [1] : vector<8x256xf32> to vector<8xf32>
    %45 = vector.shape_cast %44 : vector<8xf32> to vector<8x1xf32>
    %cst_21 = arith.constant 3.906250e-03 : f32
    %46 = vector.broadcast %cst_21 : f32 to vector<8x1xf32>
    %47 = arith.mulf %42, %46 : vector<8x1xf32>
    %cst_22 = arith.constant 3.906250e-03 : f32
    %48 = vector.broadcast %cst_22 : f32 to vector<8x1xf32>
    %49 = arith.mulf %45, %48 : vector<8x1xf32>
    %50 = arith.mulf %47, %47 : vector<8x1xf32>
    %51 = arith.subf %49, %50 : vector<8x1xf32>
    %cst_23 = arith.constant 0.000000e+00 : f32
    %52 = vector.broadcast %cst_23 : f32 to vector<8x1xf32>
    %53 = arith.maximumf %51, %52 : vector<8x1xf32>
    %cst_24 = arith.constant 9.99999974E-6 : f32
    %54 = vector.broadcast %cst_24 : f32 to vector<8x1xf32>
    %55 = arith.addf %53, %54 : vector<8x1xf32>
    %56 = math.rsqrt %55 : vector<8x1xf32>
    %c1_25 = arith.constant 1 : index
    %c0_26 = arith.constant 0 : index
    %57 = vector.load %arg5[%c1_25, %c0_26] : memref<3x256xf32, #tpu.memory_space<vmem>>, vector<1x256xf32>
    %58 = vector.broadcast %57 : vector<1x256xf32> to vector<8x256xf32>
    %59 = vector.broadcast %56 : vector<8x1xf32> to vector<8x256xf32>
    %60 = arith.mulf %58, %59 : vector<8x256xf32>
    %c2_27 = arith.constant 2 : index
    %c0_28 = arith.constant 0 : index
    %61 = vector.load %arg5[%c2_27, %c0_28] : memref<3x256xf32, #tpu.memory_space<vmem>>, vector<1x256xf32>
    %62 = vector.broadcast %47 : vector<8x1xf32> to vector<8x256xf32>
    %63 = arith.mulf %62, %60 : vector<8x256xf32>
    %64 = vector.broadcast %61 : vector<1x256xf32> to vector<8x256xf32>
    %65 = arith.subf %64, %63 : vector<8x256xf32>
    %66 = arith.mulf %40, %60 : vector<8x256xf32>
    %67 = arith.addf %66, %65 : vector<8x256xf32>
    %cst_29 = arith.constant 0.000000e+00 : f32
    %68 = vector.broadcast %cst_29 : f32 to vector<8x256xf32>
    %69 = arith.maximumf %67, %68 : vector<8x256xf32>
    %c0_30 = arith.constant 0 : index
    %c0_31 = arith.constant 0 : index
    %70 = vector.load %arg6[%c0_30, %c0_31] : memref<1x256xf32, #tpu.memory_space<vmem>>, vector<1x256xf32>
    %71 = vector.broadcast %70 : vector<1x256xf32> to vector<8x256xf32>
    %72 = arith.mulf %69, %71 : vector<8x256xf32>
    %cst_32 = arith.constant dense<0.000000e+00> : vector<8xf32>
    %73 = vector.multi_reduction <add>, %72, %cst_32 [1] : vector<8x256xf32> to vector<8xf32>
    %74 = vector.shape_cast %73 : vector<8xf32> to vector<8x1xf32>
    %c0_33 = arith.constant 0 : index
    %c0_34 = arith.constant 0 : index
    %75 = memref.load %arg7[%c0_33, %c0_34] : memref<1x1xf32, #tpu.memory_space<smem>>
    %76 = vector.broadcast %75 : f32 to vector<8x1xf32>
    %77 = arith.addf %74, %76 : vector<8x1xf32>
    %c0_35 = arith.constant 0 : index
    %c0_36 = arith.constant 0 : index
    %78 = vector.load %arg8[%c0_35, %c0_36] : memref<8x1xf32, #tpu.memory_space<vmem>>, vector<8x1xf32>
    tpu.vector_store %arg8[%c0_35, %c0_36], %77 {strides = array<i32>} : memref<8x1xf32, #tpu.memory_space<vmem>>, vector<8x1xf32>,
    return
  }
  func.func @transform_0(%arg0: i32) -> (i32, i32) {
    %c0_i32 = arith.constant 0 : i32
    %c0_i32_0 = arith.constant 0 : i32
    return %arg0, %c0_i32 : i32, i32
  }
  func.func @transform_1(%arg0: i32) -> (i32, i32) {
    %c0_i32 = arith.constant 0 : i32
    %c0_i32_0 = arith.constant 0 : i32
    %c0_i32_1 = arith.constant 0 : i32
    return %c0_i32, %c0_i32_0 : i32, i32
  }
  func.func @transform_2(%arg0: i32) -> (i32, i32) {
    %c0_i32 = arith.constant 0 : i32
    %c0_i32_0 = arith.constant 0 : i32
    %c0_i32_1 = arith.constant 0 : i32
    return %c0_i32, %c0_i32_0 : i32, i32
  }
  func.func @transform_3(%arg0: i32) -> (i32, i32) {
    %c0_i32 = arith.constant 0 : i32
    %c0_i32_0 = arith.constant 0 : i32
    %c0_i32_1 = arith.constant 0 : i32
    return %c0_i32, %c0_i32_0 : i32, i32
  }
  func.func @transform_4(%arg0: i32) -> (i32, i32) {
    %c0_i32 = arith.constant 0 : i32
    %c0_i32_0 = arith.constant 0 : i32
    %c0_i32_1 = arith.constant 0 : i32
    return %c0_i32, %c0_i32_0 : i32, i32
  }
  func.func @transform_5(%arg0: i32) -> (i32, i32) {
    %c0_i32 = arith.constant 0 : i32
    %c0_i32_0 = arith.constant 0 : i32
    %c0_i32_1 = arith.constant 0 : i32
    return %c0_i32, %c0_i32_0 : i32, i32
  }
  func.func @transform_6(%arg0: i32) -> (i32, i32) {
    %c0_i32 = arith.constant 0 : i32
    %c0_i32_0 = arith.constant 0 : i32
    %c0_i32_1 = arith.constant 0 : i32
    return %c0_i32, %c0_i32_0 : i32, i32
  }
  func.func @transform_7(%arg0: i32) -> (i32, i32) {
    %c0_i32 = arith.constant 0 : i32
    %c0_i32_0 = arith.constant 0 : i32
    return %arg0, %c0_i32 : i32, i32
  }
}

</mosaic_0001>

<llo_original>
// kernel: tpu_custom_call.1
$region0: #{tpu_custom_call.1}
  #allocation0 [shape = 'u32[]', space=smem, size = 0x4, offset = 0x4, fixed_abs, tag = 'smem constant byte address 0x4 - core index']
  #allocation1 [shape = 'u32[144,128]{1,0:T(1,128)}', space=vmem, size = 0x12000, scoped, tag = 'internal scratch']
  #allocation2 [shape = 'f32[1,1]{1,0:T(1,128)S(6)}', space=smem, size = 0x200, scoped, tag = 'scoped memory for tpu_custom_call.1']
  %s0 = inlined_call_operand.hbm [shape: f32[8,8], index: 0, kind: input, shape index: {}]
  %s1 = inlined_call_operand.hbm [shape: f32[8,256], index: 1, kind: input, shape index: {}]
  %s2 = inlined_call_operand.vmem [shape: f32[3,256], index: 2, kind: input, shape index: {}]
  %s3 = inlined_call_operand.hbm [shape: bf16[256,256], index: 3, kind: input, shape index: {}]
  %s4 = inlined_call_operand.vmem [shape: f32[3,256], index: 4, kind: input, shape index: {}]
  %s5 = inlined_call_operand.vmem [shape: f32[1,256], index: 5, kind: input, shape index: {}]
  %s6 = inlined_call_operand.<no memory space> [shape: f32[1,1], index: 6, kind: input, shape index: {}]
  %s7 = inlined_call_operand.vmem [shape: f32[8,1], index: 7, kind: output, shape index: {}]
  %s8 = sld [smem:[#allocation0]]
  $region50: #{tpu_custom_call.1} parent=0
    _
  %s10 = ssub.s32 1, %s8
  %s11 = scalar_select 0, %s10, %s8
  %12 = sst [smem:[#allocation2]] %s6
  $region1: #{tpu_custom_call.1} parent=0
    #allocation3 [shape = 'u8[4096]{0}', space=vmem, size = 0x1000, scoped, tag = 'input window, operand 0, single buffered']
    #allocation4 [shape = 's32[1]{0}', space=sflag, size = 0x4, scoped, tag = 'scoped memory for tpu_custom_call.1']
    #allocation5 [shape = 'u8[8192]{0}', space=vmem, size = 0x2000, scoped, tag = 'input window, operand 1, single buffered']
    #allocation6 [shape = 's32[1]{0}', space=sflag, size = 0x4, scoped, tag = 'scoped memory for tpu_custom_call.1']
    #allocation7 [shape = 'u8[131072]{0}', space=vmem, size = 0x20000, scoped, tag = 'input window, operand 3, single buffered']
    %13 = vsyncpa [#allocation4], 0
    %14 = vsyncpa [#allocation6], 0
    // Predicated region
    $region2: #{tpu_custom_call.1} parent=1 // pred_check
      _
    $region3: #{tpu_custom_call.1} parent=1 // pred_check_branch
      %16 = sbr.rel (0) target = $region5
    $region4: #{tpu_custom_call.1} parent=1 // pred_region
      %s18 = ssub.s32 128, 128
      %19 = vsyncadd [#allocation4], %s18
      %s21 = sshll.u32 [#allocation3], 4
      %s22 = int_to_ptr.vmem [resolvable:$true] %s21
      %24 = dma.hbm_to_vmem [thread:$0]  %s0, 128, %s22, [#allocation4]
    $region5: #{tpu_custom_call.1} parent=1 // pred_fallthru
      _
    // Predicated region
    $region6: #{tpu_custom_call.1} parent=1 // pred_check
      _
    $region7: #{tpu_custom_call.1} parent=1 // pred_check_branch
      %26 = sbr.rel (0) target = $region9
    $region8: #{tpu_custom_call.1} parent=1 // pred_region
      %s28 = ssub.s32 256, 256
      %29 = vsyncadd [#allocation6], %s28
      %s31 = sshll.u32 [#allocation5], 4
      %s32 = int_to_ptr.vmem [resolvable:$true] %s31
      %34 = dma.hbm_to_vmem [thread:$0]  %s1, 256, %s32, [#allocation6]
    $region9: #{tpu_custom_call.1} parent=1 // pred_fallthru
      _
    // Predicated region
    $region10: #{tpu_custom_call.1} parent=1 // pred_check
      _
    $region11: #{tpu_custom_call.1} parent=1 // pred_check_branch
      %36 = sbr.rel (0) target = $region13
    $region12: #{tpu_custom_call.1} parent=1 // pred_region
      _
    $region13: #{tpu_custom_call.1} parent=1 // pred_fallthru
      _
    // Predicated region
    $region14: #{tpu_custom_call.1} parent=1 // pred_check
      _
    $region15: #{tpu_custom_call.1} parent=1 // pred_check_branch
      %38 = sbr.rel (0) target = $region17
    $region16: #{tpu_custom_call.1} parent=1 // pred_region
      %s40 = ssub.s32 4096, 4096
      %41 = vsyncadd [#allocation6], %s40
      %s42 = sshll.u32 [#allocation7], 4
      %s43 = int_to_ptr.vmem [resolvable:$true] %s42
      %48 = dma.hbm_to_vmem [thread:$0]  %s3, 4096, %s43, [#allocation6], 128, 128, 8
    $region17: #{tpu_custom_call.1} parent=1 // pred_fallthru
      _
    // Predicated region
    $region18: #{tpu_custom_call.1} parent=1 // pred_check
      _
    $region19: #{tpu_custom_call.1} parent=1 // pred_check_branch
      %50 = sbr.rel (0) target = $region21
    $region20: #{tpu_custom_call.1} parent=1 // pred_region
      _
    $region21: #{tpu_custom_call.1} parent=1 // pred_fallthru
      _
    // Predicated region
    $region22: #{tpu_custom_call.1} parent=1 // pred_check
      _
    $region23: #{tpu_custom_call.1} parent=1 // pred_check_branch
      %52 = sbr.rel (0) target = $region25
    $region24: #{tpu_custom_call.1} parent=1 // pred_region
      _
    $region25: #{tpu_custom_call.1} parent=1 // pred_fallthru
      _
    // Predicated region
    $region26: #{tpu_custom_call.1} parent=1 // pred_check
      _
    $region27: #{tpu_custom_call.1} parent=1 // pred_check_branch
      %54 = sbr.rel (0) target = $region29
    $region28: #{tpu_custom_call.1} parent=1 // pred_region
      _
    $region29: #{tpu_custom_call.1} parent=1 // pred_fallthru
      _
    // Predicated region
    $region30: #{tpu_custom_call.1} parent=1 // pred_check
      _
    $region31: #{tpu_custom_call.1} parent=1 // pred_check_branch
      %56 = sbr.rel (0) target = $region33
    $region32: #{tpu_custom_call.1} parent=1 // pred_region
      %57 = dma.done [#allocation4], 128
    $region33: #{tpu_custom_call.1} parent=1 // pred_fallthru
      _
    // Predicated region
    $region34: #{tpu_custom_call.1} parent=1 // pred_check
      _
    $region35: #{tpu_custom_call.1} parent=1 // pred_check_branch
      %59 = sbr.rel (0) target = $region37
    $region36: #{tpu_custom_call.1} parent=1 // pred_region
      %60 = dma.done [#allocation6], 256
    $region37: #{tpu_custom_call.1} parent=1 // pred_fallthru
      _
    // Predicated region
    $region38: #{tpu_custom_call.1} parent=1 // pred_check
      _
    $region39: #{tpu_custom_call.1} parent=1 // pred_check_branch
      %62 = sbr.rel (0) target = $region41
    $region40: #{tpu_custom_call.1} parent=1 // pred_region
      %63 = dma.done [#allocation6], 4096
    $region41: #{tpu_custom_call.1} parent=1 // pred_fallthru
      _
    %v64 = vld [vmem:[#allocation3] sm:$0xff]
    %v65 = vld [vmem:[#allocation5] sm:$0xff]
    %v66 = vld [vmem:[#allocation5 + $0x8] sm:$0xff]
    %v67 = vld [vmem:[%s2] ss:$4 sm:$0x3]
    %v69 = vlaneseq
    %v70 = vshrl.u32 %v69, 7
    %v71 = vsub.s32 0, %v70
    %v72 = vrot.slane %v67, %v71
    %v73 = vlaneseq
    %v74 = vshrl.u32 %v73, 7
    %v75 = vsub.s32 1, %v74
    %v76 = vrot.slane %v67, %v75
    %vm79 = vcmask 64512
    %v81 = vsel %vm79, %v64, 0
    %83 = vmatprep.subr.mxu0 %v66
    %84 = vmatpush1.msra.mxu0 %v65
    %85 = vmatprep.subr.mxu0 0.0
    %86 = vmatpush1.msra.mxu0 0.0
    %87 = vmatprep.subr.mxu0 0.0
    %88 = vmatpush1.msra.mxu0 0.0
    %89 = vmatprep.subr.mxu0 0.0
    %90 = vmatpush1.msra.mxu0 0.0
    %91 = vmatprep.subr.mxu0 0.0
    %92 = vmatpush1.msra.mxu0 0.0
    %93 = vmatprep.subr.mxu0 0.0
    %94 = vmatpush1.msra.mxu0 0.0
    %95 = vmatprep.subr.mxu0 0.0
    %96 = vmatpush1.msra.mxu0 0.0
    %97 = vmatprep.subr.mxu0 0.0
    %98 = vmatpush1.msra.mxu0 0.0
    %99 = vmatprep.subr.mxu0 0.0
    %100 = vmatpush1.msra.mxu0 0.0
    %101 = vmatprep.subr.mxu0 0.0
    %102 = vmatpush1.msra.mxu0 0.0
    %103 = vmatprep.subr.mxu0 0.0
    %104 = vmatpush1.msra.mxu0 0.0
    %105 = vmatprep.subr.mxu0 0.0
    %106 = vmatpush1.msra.mxu0 0.0
    %107 = vmatprep.subr.mxu0 0.0
    %108 = vmatpush1.msra.mxu0 0.0
    %109 = vmatprep.subr.mxu0 0.0
    %110 = vmatpush1.msra.mxu0 0.0
    %111 = vmatprep.subr.mxu0 0.0
    %112 = vmatpush1.msra.mxu0 0.0
    %113 = vmatprep.subr.mxu0 0.0
    %114 = vmatpush1.msra.mxu0 0.0
    %115 = vmatprep.subr.mxu0 0.0
    %116 = vmatpush1.msra.mxu0 0.0
    %117 = vmatprep.subr.mxu0 0.0
    %118 = vmatpush1.msra.mxu0 0.0
    %119 = vmatprep.subr.mxu0 0.0
    %120 = vmatpush1.msra.mxu0 0.0
    %121 = vmatprep.subr.mxu0 0.0
    %122 = vmatpush1.msra.mxu0 0.0
    %123 = vmatprep.subr.mxu0 0.0
    %124 = vmatpush1.msra.mxu0 0.0
    %125 = vmatprep.subr.mxu0 0.0
    %126 = vmatpush1.msra.mxu0 0.0
    %127 = vmatprep.subr.mxu0 0.0
    %128 = vmatpush1.msra.mxu0 0.0
    %129 = vmatprep.subr.mxu0 0.0
    %130 = vmatpush1.msra.mxu0 0.0
    %131 = vmatprep.subr.mxu0 0.0
    %132 = vmatpush1.msra.mxu0 0.0
    %133 = vmatprep.subr.mxu0 0.0
    %134 = vmatpush1.msra.mxu0 0.0
    %135 = vmatprep.subr.mxu0 0.0
    %136 = vmatpush1.msra.mxu0 0.0
    %137 = vmatprep.subr.mxu0 0.0
    %138 = vmatpush1.msra.mxu0 0.0
    %139 = vmatprep.subr.mxu0 0.0
    %140 = vmatpush1.msra.mxu0 0.0
    %141 = vmatprep.subr.mxu0 0.0
    %142 = vmatpush1.msra.mxu0 0.0
    %143 = vmatprep.subr.mxu0 0.0
    %144 = vmatpush1.msra.mxu0 0.0
    %145 = vmatprep.subr.mxu0 0.0
    %146 = vmatpush1.msra.mxu0 0.0
    %147 = vmatprep.mubr.f32.mxu0 0.0
    %148 = vmatmul.mubr.f32.gmra.mrb[0].mxu0 %v81
    %v149 = vpop.f32.mrb[0].mxu0
    %v150 = vadd.f32 %v72, %v149
    %v151 = vpop.f32.mrb[0].mxu0
    %v152 = vadd.f32 %v76, %v151
    %153 = vdwg.mxu0
    %v154 = vadd.f32 %v150, %v152
    %155 = vadd.xlane.f32.xlu0 %v154
    %v156 = vpop.xlane.xlu0 %155
    %v157 = vmul.f32 %v150, %v150
    %v158 = vmul.f32 %v152, %v152
    %v159 = vadd.f32 %v157, %v158
    %160 = vadd.xlane.f32.xlu0 %v159
    %v161 = vpop.xlane.xlu0 %160
    %v162 = vmul.f32 %v156, 0.00390625
    %v163 = vmul.f32 %v161, 0.00390625
    %v164 = vmul.f32 %v162, %v162
    %v165 = vsub.f32 %v163, %v164
    %v166 = vmax.f32 %v165, 0.0
    %v167 = vadd.f32 %v166, 1e-05
    %v168 = vrsqrt.pop %v167
    %s169 = scalar_lea.vmem %s2, 1
    %v170 = vld [vmem:[%s169] ss:$4 sm:$0x3]
    %v172 = vlaneseq
    %v173 = vshrl.u32 %v172, 7
    %v174 = vsub.s32 0, %v173
    %v175 = vrot.slane %v170, %v174
    %v176 = vlaneseq
    %v177 = vshrl.u32 %v176, 7
    %v178 = vsub.s32 1, %v177
    %v179 = vrot.slane %v170, %v178
    %v182 = vmul.f32 %v175, %v168
    %v183 = vmul.f32 %v179, %v168
    %s184 = scalar_lea.vmem %s2, 2
    %v185 = vld [vmem:[%s184] ss:$4 sm:$0x3]
    %v186 = vmul.f32 %v162, %v182
    %v187 = vmul.f32 %v162, %v183
    %v189 = vlaneseq
    %v190 = vshrl.u32 %v189, 7
    %v191 = vsub.s32 0, %v190
    %v192 = vrot.slane %v185, %v191
    %v193 = vlaneseq
    %v194 = vshrl.u32 %v193, 7
    %v195 = vsub.s32 1, %v194
    %v196 = vrot.slane %v185, %v195
    %v199 = vsub.f32 %v192, %v186
    %v200 = vsub.f32 %v196, %v187
    %v201 = vmul.f32 %v150, %v182
    %v202 = vmul.f32 %v152, %v183
    %v203 = vadd.f32 %v201, %v199
    %v204 = vadd.f32 %v202, %v200
    %v205 = vmax.f32 %v203, 0.0
    %v206 = vmax.f32 %v204, 0.0
    %v207 = vld [vmem:[#allocation7] sm:$0xff]
    %v208 = vld [vmem:[#allocation7 + $0x8] sm:$0xff]
    %v209 = vld [vmem:[#allocation7 + $0x10] sm:$0xff]
    %v210 = vld [vmem:[#allocation7 + $0x18] sm:$0xff]
    %v211 = vld [vmem:[#allocation7 + $0x20] sm:$0xff]
    %v212 = vld [vmem:[#allocation7 + $0x28] sm:$0xff]
    %v213 = vld [vmem:[#allocation7 + $0x30] sm:$0xff]
    %v214 = vld [vmem:[#allocation7 + $0x38] sm:$0xff]
    %v215 = vld [vmem:[#allocation7 + $0x40] sm:$0xff]
    %v216 = vld [vmem:[#allocation7 + $0x48] sm:$0xff]
    %v217 = vld [vmem:[#allocation7 + $0x50] sm:$0xff]
    %v218 = vld [vmem:[#allocation7 + $0x58] sm:$0xff]
    %v219 = vld [vmem:[#allocation7 + $0x60] sm:$0xff]
    %v220 = vld [vmem:[#allocation7 + $0x68] sm:$0xff]
    %v221 = vld [vmem:[#allocation7 + $0x70] sm:$0xff]
    %v222 = vld [vmem:[#allocation7 + $0x78] sm:$0xff]
    %v223 = vld [vmem:[#allocation7 + $0x80] sm:$0xff]
    %v224 = vld [vmem:[#allocation7 + $0x88] sm:$0xff]
    %v225 = vld [vmem:[#allocation7 + $0x90] sm:$0xff]
    %v226 = vld [vmem:[#allocation7 + $0x98] sm:$0xff]
    %v227 = vld [vmem:[#allocation7 + $0xa0] sm:$0xff]
    %v228 = vld [vmem:[#allocation7 + $0xa8] sm:$0xff]
    %v229 = vld [vmem:[#allocation7 + $0xb0] sm:$0xff]
    %v230 = vld [vmem:[#allocation7 + $0xb8] sm:$0xff]
    %v231 = vld [vmem:[#allocation7 + $0xc0] sm:$0xff]
    %v232 = vld [vmem:[#allocation7 + $0xc8] sm:$0xff]
    %v233 = vld [vmem:[#allocation7 + $0xd0] sm:$0xff]
    %v234 = vld [vmem:[#allocation7 + $0xd8] sm:$0xff]
    %v235 = vld [vmem:[#allocation7 + $0xe0] sm:$0xff]
    %v236 = vld [vmem:[#allocation7 + $0xe8] sm:$0xff]
    %v237 = vld [vmem:[#allocation7 + $0xf0] sm:$0xff]
    %v238 = vld [vmem:[#allocation7 + $0xf8] sm:$0xff]
    %v239 = vpack.c.bf16 %v205, %v205
    %v240 = vpack.c.bf16 %v206, %v206
    %v241 = vld [vmem:[%s4] ss:$4 sm:$0x3]
    %v243 = vlaneseq
    %v244 = vshrl.u32 %v243, 7
    %v245 = vsub.s32 0, %v244
    %v246 = vrot.slane %v241, %v245
    %v247 = vlaneseq
    %v248 = vshrl.u32 %v247, 7
    %v249 = vsub.s32 1, %v248
    %v250 = vrot.slane %v241, %v249
    %v285 = vunpack.c.l.b16 %v207
    %v286 = vunpack.c.h.b16 %v207
    %v287 = vunpack.c.l.b16 %v208
    %v288 = vunpack.c.h.b16 %v208
    %v289 = vunpack.c.l.b16 %v209
    %v290 = vunpack.c.h.b16 %v209
    %v291 = vunpack.c.l.b16 %v210
    %v292 = vunpack.c.h.b16 %v210
    %v293 = vunpack.c.l.b16 %v211
    %v294 = vunpack.c.h.b16 %v211
    %v295 = vunpack.c.l.b16 %v212
    %v296 = vunpack.c.h.b16 %v212
    %v297 = vunpack.c.l.b16 %v213
    %v298 = vunpack.c.h.b16 %v213
    %v299 = vunpack.c.l.b16 %v214
    %v300 = vunpack.c.h.b16 %v214
    %v301 = vunpack.c.l.b16 %v215
    %v302 = vunpack.c.h.b16 %v215
    %v303 = vunpack.c.l.b16 %v216
    %v304 = vunpack.c.h.b16 %v216
    %v305 = vunpack.c.l.b16 %v217
    %v306 = vunpack.c.h.b16 %v217
    %v307 = vunpack.c.l.b16 %v218
    %v308 = vunpack.c.h.b16 %v218
    %v309 = vunpack.c.l.b16 %v219
    %v310 = vunpack.c.h.b16 %v219
    %v311 = vunpack.c.l.b16 %v220
    %v312 = vunpack.c.h.b16 %v220
    %v313 = vunpack.c.l.b16 %v221
    %v314 = vunpack.c.h.b16 %v221
    %v315 = vunpack.c.l.b16 %v222
    %v316 = vunpack.c.h.b16 %v222
    %v317 = vunpack.c.l.b16 %v223
    %v318 = vunpack.c.h.b16 %v223
    %v319 = vunpack.c.l.b16 %v224
    %v320 = vunpack.c.h.b16 %v224
    %v321 = vunpack.c.l.b16 %v225
    %v322 = vunpack.c.h.b16 %v225
    %v323 = vunpack.c.l.b16 %v226
    %v324 = vunpack.c.h.b16 %v226
    %v325 = vunpack.c.l.b16 %v227
    %v326 = vunpack.c.h.b16 %v227
    %v327 = vunpack.c.l.b16 %v228
    %v328 = vunpack.c.h.b16 %v228
    %v329 = vunpack.c.l.b16 %v229
    %v330 = vunpack.c.h.b16 %v229
    %v331 = vunpack.c.l.b16 %v230
    %v332 = vunpack.c.h.b16 %v230
    %v333 = vunpack.c.l.b16 %v231
    %v334 = vunpack.c.h.b16 %v231
    %v335 = vunpack.c.l.b16 %v232
    %v336 = vunpack.c.h.b16 %v232
    %v337 = vunpack.c.l.b16 %v233
    %v338 = vunpack.c.h.b16 %v233
    %v339 = vunpack.c.l.b16 %v234
    %v340 = vunpack.c.h.b16 %v234
    %v341 = vunpack.c.l.b16 %v235
    %v342 = vunpack.c.h.b16 %v235
    %v343 = vunpack.c.l.b16 %v236
    %v344 = vunpack.c.h.b16 %v236
    %v345 = vunpack.c.l.b16 %v237
    %v346 = vunpack.c.h.b16 %v237
    %v347 = vunpack.c.l.b16 %v238
    %v348 = vunpack.c.h.b16 %v238
    %v349 = vpack.c.b16 %v287, %v285
    %v350 = vpack.c.b16 %v288, %v286
    %v351 = vpack.c.b16 %v291, %v289
    %v352 = vpack.c.b16 %v292, %v290
    %v353 = vpack.c.b16 %v295, %v293
    %v354 = vpack.c.b16 %v296, %v294
    %v355 = vpack.c.b16 %v299, %v297
    %v356 = vpack.c.b16 %v300, %v298
    %v357 = vpack.c.b16 %v303, %v301
    %v358 = vpack.c.b16 %v304, %v302
    %v359 = vpack.c.b16 %v307, %v305
    %v360 = vpack.c.b16 %v308, %v306
    %v361 = vpack.c.b16 %v311, %v309
    %v362 = vpack.c.b16 %v312, %v310
    %v363 = vpack.c.b16 %v315, %v313
    %v364 = vpack.c.b16 %v316, %v314
    %v365 = vpack.c.b16 %v319, %v317
    %v366 = vpack.c.b16 %v320, %v318
    %v367 = vpack.c.b16 %v323, %v321
    %v368 = vpack.c.b16 %v324, %v322
    %v369 = vpack.c.b16 %v327, %v325
    %v370 = vpack.c.b16 %v328, %v326
    %v371 = vpack.c.b16 %v331, %v329
    %v372 = vpack.c.b16 %v332, %v330
    %v373 = vpack.c.b16 %v335, %v333
    %v374 = vpack.c.b16 %v336, %v334
    %v375 = vpack.c.b16 %v339, %v337
    %v376 = vpack.c.b16 %v340, %v338
    %v377 = vpack.c.b16 %v343, %v341
    %v378 = vpack.c.b16 %v344, %v342
    %v379 = vpack.c.b16 %v347, %v345
    %v380 = vpack.c.b16 %v348, %v346
    %413 = vmatprep.subr.bf16.mxu0 %v350
    %414 = vmatpush1.bf16.msra.mxu0 %v349
    %415 = vmatprep.subr.bf16.mxu0 %v352
    %416 = vmatpush1.bf16.msra.mxu0 %v351
    %417 = vmatprep.subr.bf16.mxu0 %v354
    %418 = vmatpush1.bf16.msra.mxu0 %v353
    %419 = vmatprep.subr.bf16.mxu0 %v356
    %420 = vmatpush1.bf16.msra.mxu0 %v355
    %421 = vmatprep.subr.bf16.mxu0 %v358
    %422 = vmatpush1.bf16.msra.mxu0 %v357
    %423 = vmatprep.subr.bf16.mxu0 %v360
    %424 = vmatpush1.bf16.msra.mxu0 %v359
    %425 = vmatprep.subr.bf16.mxu0 %v362
    %426 = vmatpush1.bf16.msra.mxu0 %v361
    %427 = vmatprep.subr.bf16.mxu0 %v364
    %428 = vmatpush1.bf16.msra.mxu0 %v363
    %429 = vmatprep.subr.bf16.mxu0 %v366
    %430 = vmatpush1.bf16.msra.mxu0 %v365
    %431 = vmatprep.subr.bf16.mxu0 %v368
    %432 = vmatpush1.bf16.msra.mxu0 %v367
    %433 = vmatprep.subr.bf16.mxu0 %v370
    %434 = vmatpush1.bf16.msra.mxu0 %v369
    %435 = vmatprep.subr.bf16.mxu0 %v372
    %436 = vmatpush1.bf16.msra.mxu0 %v371
    %437 = vmatprep.subr.bf16.mxu0 %v374
    %438 = vmatpush1.bf16.msra.mxu0 %v373
    %439 = vmatprep.subr.bf16.mxu0 %v376
    %440 = vmatpush1.bf16.msra.mxu0 %v375
    %441 = vmatprep.subr.bf16.mxu0 %v378
    %442 = vmatpush1.bf16.msra.mxu0 %v377
    %443 = vmatprep.subr.bf16.mxu0 %v380
    %444 = vmatpush1.bf16.msra.mxu0 %v379
    %445 = vmatprep.mubr.bf16.mxu0 %v240
    %446 = vmatmul.mubr.bf16.gmra.mrb[0].mxu0 %v239
    %v447 = vpop.f32.mrb[0].mxu0
    %v448 = vadd.f32 %v246, %v447
    %v449 = vpop.f32.mrb[0].mxu0
    %v450 = vadd.f32 %v250, %v449
    %v451 = vpop.f32.mrb[0].mxu0
    %v452 = vpop.f32.mrb[0].mxu0
    %453 = vdwg.mxu0
    %v454 = vadd.f32 %v448, %v450
    %455 = vadd.xlane.f32.xlu0 %v454
    %v456 = vpop.xlane.xlu0 %455
    %v457 = vmul.f32 %v448, %v448
    %v458 = vmul.f32 %v450, %v450
    %v459 = vadd.f32 %v457, %v458
    %460 = vadd.xlane.f32.xlu0 %v459
    %v461 = vpop.xlane.xlu0 %460
    %v462 = vmul.f32 %v456, 0.00390625
    %v463 = vmul.f32 %v461, 0.00390625
    %v464 = vmul.f32 %v462, %v462
    %v465 = vsub.f32 %v463, %v464
    %v466 = vmax.f32 %v465, 0.0
    %v467 = vadd.f32 %v466, 1e-05
    %v468 = vrsqrt.pop %v467
    %s469 = scalar_lea.vmem %s4, 1
    %v470 = vld [vmem:[%s469] ss:$4 sm:$0x3]
    %v472 = vlaneseq
    %v473 = vshrl.u32 %v472, 7
    %v474 = vsub.s32 0, %v473
    %v475 = vrot.slane %v470, %v474
    %v476 = vlaneseq
    %v477 = vshrl.u32 %v476, 7
    %v478 = vsub.s32 1, %v477
    %v479 = vrot.slane %v470, %v478
    %v482 = vmul.f32 %v475, %v468
    %v483 = vmul.f32 %v479, %v468
    %s484 = scalar_lea.vmem %s4, 2
    %v485 = vld [vmem:[%s484] ss:$4 sm:$0x3]
    %v486 = vmul.f32 %v462, %v482
    %v487 = vmul.f32 %v462, %v483
    %v489 = vlaneseq
    %v490 = vshrl.u32 %v489, 7
    %v491 = vsub.s32 0, %v490
    %v492 = vrot.slane %v485, %v491
    %v493 = vlaneseq
    %v494 = vshrl.u32 %v493, 7
    %v495 = vsub.s32 1, %v494
    %v496 = vrot.slane %v485, %v495
    %v499 = vsub.f32 %v492, %v486
    %v500 = vsub.f32 %v496, %v487
    %v501 = vmul.f32 %v448, %v482
    %v502 = vmul.f32 %v450, %v483
    %v503 = vadd.f32 %v501, %v499
    %v504 = vadd.f32 %v502, %v500
    %v505 = vmax.f32 %v503, 0.0
    %v506 = vmax.f32 %v504, 0.0
    %v507 = vld [vmem:[%s5] sm:$0x3]
    %v509 = vlaneseq
    %v510 = vshrl.u32 %v509, 7
    %v511 = vsub.s32 0, %v510
    %v512 = vrot.slane %v507, %v511
    %v513 = vlaneseq
    %v514 = vshrl.u32 %v513, 7
    %v515 = vsub.s32 1, %v514
    %v516 = vrot.slane %v507, %v515
    %v519 = vmul.f32 %v505, %v512
    %v520 = vmul.f32 %v506, %v516
    %v521 = vadd.f32 %v519, %v520
    %522 = vadd.xlane.f32.xlu0 %v521
    %v523 = vpop.xlane.xlu0 %522
    %s524 = sld [smem:[#allocation2]]
    %v525 = vstv %s524
    %v526 = vadd.f32 %v523, %v525
    %vm527 = vcmask 7168
    %528 = vst.msk [vmem:[%s7] sm:$0xff] %vm527, %v526
    // Predicated region
    $region42: #{tpu_custom_call.1} parent=1 // pred_check
      _
    $region43: #{tpu_custom_call.1} parent=1 // pred_check_branch
      %530 = sbr.rel (0) target = $region45
    $region44: #{tpu_custom_call.1} parent=1 // pred_region
      _
    $region45: #{tpu_custom_call.1} parent=1 // pred_fallthru
      _
    // Predicated region
    $region46: #{tpu_custom_call.1} parent=1 // pred_check
      _
    $region47: #{tpu_custom_call.1} parent=1 // pred_check_branch
      %532 = sbr.rel (0) target = $region49
    $region48: #{tpu_custom_call.1} parent=1 // pred_region
      _
    $region49: #{tpu_custom_call.1} parent=1 // pred_fallthru
      _
    %533 = vsyncpa [#allocation4], 1
    %534 = vsyncpa [#allocation6], 1

</llo_original>
